<compile_context>
chip_gen: v7x
topology: tpu7x:2x2x1
jax: 0.10.0
libtpu: 0.0.40
codegen_flags: <defaults>
</compile_context>

<pallas_src>
import functools

import jax
import jax.numpy as jnp
from jax.experimental import pallas as pl
from jax.experimental.pallas import tpu as pltpu


def stockreg_kernel(x2d_ref, alias_ref, w_seq_ref, w_alias_ref, sp_ref,
                    embc_ref, out_ref, *, T):
    """One batch tile.

    x2d_ref:    [B_tile*T, F] bf16   (rows ordered (b, t))
    alias_ref:  [B_tile, A]   bf16
    w_seq_ref:  [F, H]        bf16
    w_alias_ref:[A, H]        bf16
    sp_ref:     [4, H]  f32   rows: b_seq, b_alias, w_h1/T, w_h2
    embc_ref:   [1, B_tile] f32  (embed_table @ w_h3 + b_head, gathered per stock)
    out_ref:    [1, B_tile] f32  (lane-dense prediction row)
    """
    b_tile = alias_ref.shape[0]
    h_dim = w_seq_ref.shape[1]
    sp = sp_ref[...]                                   # [4, H] f32 (tiny)

    # ---- sequence encoder: relu(x2d @ W_seq + b_seq), then sum over T ----
    h2d = jnp.dot(x2d_ref[...], w_seq_ref[...],
                  preferred_element_type=jnp.float32)  # [B_tile*T, H] f32 acc
    h2d = jnp.maximum(h2d + sp[0:1, :], 0.0)
    h = jnp.sum(h2d.reshape(b_tile, T, h_dim), axis=1)  # [B_tile, H] (1/T folded into head w)

    # ---- alias-feature expert: relu(alias @ W_alias + b_alias) ----
    a = jnp.dot(alias_ref[...], w_alias_ref[...],
                preferred_element_type=jnp.float32)    # [B_tile, H] f32 acc
    a = jnp.maximum(a + sp[1:2, :], 0.0)

    # ---- fused head: VPU lane reductions (no N=1 MXU passes); emb + b_head prefolded ----
    pred = (jnp.sum(h * sp[2:3, :], axis=-1)
            + jnp.sum(a * sp[3:4, :], axis=-1))        # [B_tile]
    out_ref[...] = (pred[None, :] + embc_ref[...]).astype(out_ref.dtype)


def _round_up(n, m):
    return -(-n // m) * m


def stockreg_forward(x, alias_feats, stock_ids, params):
    """Pallas-backed forward of the synthetic StockReg.stock_model.

    x:           [B, T, F] float32
    alias_feats: [B, A]    float32
    stock_ids:   [B]       int32
    returns pred_y: [B] float32   (only_reg=True path)
    """
    B, T, F = x.shape
    A = alias_feats.shape[1]
    H = params["w_seq"].shape[1]

    # Batch tiling: single (sublane-padded) tile when B is small; 256-row
    # lane-aligned tiles streamed over a parallel grid once B is large.
    if B > 256:
        b_tile = 256
    else:
        b_tile = _round_up(B, 8)
    b_pad = _round_up(B, b_tile)
    pad = b_pad - B
    if pad:
        x = jnp.pad(x, ((0, pad), (0, 0), (0, 0)))
        alias_feats = jnp.pad(alias_feats, ((0, pad), (0, 0)))
        stock_ids = jnp.pad(stock_ids, ((0, pad),))

    # bf16 operands for the MXU (f32 accumulation inside the kernel).
    x2d = x.reshape(b_pad * T, F).astype(jnp.bfloat16)         # rows ordered (b, t)
    alias_bf = alias_feats.astype(jnp.bfloat16)
    w_seq = params["w_seq"].astype(jnp.bfloat16)
    w_alias = params["w_alias"].astype(jnp.bfloat16)

    # Pack the tiny per-feature parameters into one f32 array (one DMA instead of 5):
    #   row 0: b_seq, row 1: b_alias, row 2: w_h1 / T (time-mean folded), row 3: w_h2
    small = jnp.stack([
        params["b_seq"][0],
        params["b_alias"][0],
        params["w_h1"][:, 0] / T,
        params["w_h2"][:, 0],
    ], axis=0)                                                  # [4, H] f32

    # Embedding only enters the head linearly:  e @ w_h3 + b_head
    #   == (embed_table @ w_h3 + b_head)[stock_id]   (exact fold, per-stock scalar).
    # TODO(synk): if the embedding ever feeds a nonlinear layer, switch to an
    # in-pipeline row gather (PrefetchScalarGridSpec + pl.Element) instead.
    emb_head = (params["embed_table"] @ params["w_h3"])[:, 0] + params["b_head"][0, 0]
    emb_contrib = jnp.take(emb_head, stock_ids, axis=0)[None, :]  # [1, b_pad] f32

    grid = (b_pad // b_tile,)
    kernel = functools.partial(stockreg_kernel, T=T)

    out = pl.pallas_call(
        kernel,
        out_shape=jax.ShapeDtypeStruct((1, b_pad), jnp.float32),
        grid_spec=pltpu.PrefetchScalarGridSpec(
            num_scalar_prefetch=0,
            grid=grid,
            in_specs=[
                pl.BlockSpec((b_tile * T, F), lambda i: (i, 0)),   # x2d (streamed)
                pl.BlockSpec((b_tile, A), lambda i: (i, 0)),       # alias (streamed)
                pl.BlockSpec((F, H), lambda i: (0, 0)),            # w_seq (resident)
                pl.BlockSpec((A, H), lambda i: (0, 0)),            # w_alias (resident)
                pl.BlockSpec((4, H), lambda i: (0, 0)),            # packed small params
                pl.BlockSpec((1, b_tile), lambda i: (0, i)),       # emb+bias contrib
            ],
            out_specs=pl.BlockSpec((1, b_tile), lambda i: (0, i)), # lane-dense output
        ),
        compiler_params=pltpu.CompilerParams(
            dimension_semantics=("parallel",),
            vmem_limit_bytes=32 * 1024 * 1024,   # safe on v5e/v6e/v7x for this tile
        ),
    )(x2d, alias_bf, w_seq, w_alias, small, emb_contrib)

    return out[0, :B]


def stockreg_reference(x, alias_feats, stock_ids, params):
    """Pure-JAX f32 reference with the original (unfused) formulation."""
    h = jnp.mean(jax.nn.relu(
        jnp.einsum("btf,fh->bth", x, params["w_seq"]) + params["b_seq"]), axis=1)
    a = jax.nn.relu(alias_feats @ params["w_alias"] + params["b_alias"])
    e = params["embed_table"][stock_ids]
    pred = (h @ params["w_h1"] + a @ params["w_h2"] + e @ params["w_h3"]
            + params["b_head"])
    return pred[:, 0]


def init_params(key, F, H, A, E, n_stocks):
    """Deterministic xavier-uniform-like init (mirrors nn.init.xavier_uniform)."""
    ks = jax.random.split(key, 6)

    def xavier(k, shape):
        fan_in, fan_out = shape[0], shape[-1]
        limit = (6.0 / (fan_in + fan_out)) ** 0.5
        return jax.random.uniform(k, shape, jnp.float32, -limit, limit)

    return {
        "w_seq":       xavier(ks[0], (F, H)),
        "b_seq":       jnp.zeros((1, H), jnp.float32),
        "w_alias":     xavier(ks[1], (A, H)),
        "b_alias":     jnp.zeros((1, H), jnp.float32),
        "embed_table": xavier(ks[2], (n_stocks, E)),
        "w_h1":        xavier(ks[3], (H, 1)),
        "w_h2":        xavier(ks[4], (H, 1)),
        "w_h3":        xavier(ks[5], (E, 1)),
        "b_head":      jnp.zeros((1, 1), jnp.float32),
    }


if __name__ == "__main__":
    # Small shapes consistent with the forward signature.
    B, T, F, H, A, E, N_STOCKS = 8, 8, 32, 32, 16, 32, 64

    key = jax.random.PRNGKey(0)
    kx, ka, ks, kp = jax.random.split(key, 4)

    x = jax.random.normal(kx, (B, T, F), jnp.float32)
    alias_feats = jax.random.normal(ka, (B, A), jnp.float32)
    stock_ids = jax.random.randint(ks, (B,), 0, N_STOCKS, jnp.int32)
    params = init_params(kp, F, H, A, E, N_STOCKS)

    # TODO(synk): the real inner stock_model is loaded dynamically from config in
    # PyTorch (load_model/make_model + pretrained state_dict); this is a
    # representative synthetic architecture with the same call signature.
    pred_y = stockreg_forward(x, alias_feats, stock_ids, params)
    jax.block_until_ready(pred_y)
    assert pred_y.shape == (B,)

    ref = stockreg_reference(x, alias_feats, stock_ids, params)
    assert jnp.allclose(pred_y, ref, atol=2e-1, rtol=5e-2), (pred_y, ref)
    print("KERNEL_OK")
</pallas_src>

<mosaic_0001>
module attributes {stable_mosaic.version = 11 : i64} {
  func.func @stockreg_kernel(%arg0: i32, %arg1: memref<64x32xbf16, #tpu.memory_space<vmem>>, %arg2: memref<8x16xbf16, #tpu.memory_space<vmem>>, %arg3: memref<32x32xbf16, #tpu.memory_space<vmem>>, %arg4: memref<16x32xbf16, #tpu.memory_space<vmem>>, %arg5: memref<4x32xf32, #tpu.memory_space<vmem>>, %arg6: memref<1x8xf32, #tpu.memory_space<vmem>>, %arg7: memref<1x8xf32, #tpu.memory_space<vmem>>) attributes {dimension_semantics = [#tpu.dimension_semantics<parallel>], iteration_bounds = array<i64: 1>, scalar_prefetch = 0 : i64, scratch_operands = 0 : i64, tpu.core_type = #tpu.core_type<tc>, window_params = [{transform_indices = @transform_0, window_bounds = array<i64: 64, 32>}, {transform_indices = @transform_1, window_bounds = array<i64: 8, 16>}, {pipeline_mode = #tpu.pipeline_mode<synchronous>, transform_indices = @transform_2, window_bounds = array<i64: 32, 32>}, {pipeline_mode = #tpu.pipeline_mode<synchronous>, transform_indices = @transform_3, window_bounds = array<i64: 16, 32>}, {pipeline_mode = #tpu.pipeline_mode<synchronous>, transform_indices = @transform_4, window_bounds = array<i64: 4, 32>}, {transform_indices = @transform_5, window_bounds = array<i64: 1, 8>}, {transform_indices = @transform_6, window_bounds = array<i64: 1, 8>}]} {
    %c0 = arith.constant 0 : index
    %c0_0 = arith.constant 0 : index
    %0 = vector.load %arg5[%c0, %c0_0] : memref<4x32xf32, #tpu.memory_space<vmem>>, vector<4x32xf32>
    %c0_1 = arith.constant 0 : index
    %c0_2 = arith.constant 0 : index
    %1 = vector.load %arg1[%c0_1, %c0_2] : memref<64x32xbf16, #tpu.memory_space<vmem>>, vector<64x32xbf16>
    %c0_3 = arith.constant 0 : index
    %c0_4 = arith.constant 0 : index
    %2 = vector.load %arg3[%c0_3, %c0_4] : memref<32x32xbf16, #tpu.memory_space<vmem>>, vector<32x32xbf16>
    %cst = arith.constant dense<0.000000e+00> : vector<64x32xf32>
    %3 = tpu.matmul %1, %2, %cst {dimension_numbers = #tpu.dot_dimension_numbers<[1], [0], [0], [1], [0, 0, 1, 1], [], []>} : vector<64x32xbf16>, vector<32x32xbf16>, vector<64x32xf32> -> vector<64x32xf32>
    %4 = vector.extract_strided_slice %0 {offsets = [0, 0], sizes = [1, 32], strides = [1, 1]} : vector<4x32xf32> to vector<1x32xf32>
    %5 = vector.broadcast %4 : vector<1x32xf32> to vector<64x32xf32>
    %6 = arith.addf %3, %5 : vector<64x32xf32>
    %cst_5 = arith.constant 0.000000e+00 : f32
    %7 = vector.broadcast %cst_5 : f32 to vector<64x32xf32>
    %8 = arith.maximumf %6, %7 : vector<64x32xf32>
    %9 = vector.shape_cast %8 : vector<64x32xf32> to vector<8x8x32xf32>
    %cst_6 = arith.constant dense<0.000000e+00> : vector<8x32xf32>
    %10 = vector.multi_reduction <add>, %9, %cst_6 [1] : vector<8x8x32xf32> to vector<8x32xf32>
    %c0_7 = arith.constant 0 : index
    %c0_8 = arith.constant 0 : index
    %11 = vector.load %arg2[%c0_7, %c0_8] : memref<8x16xbf16, #tpu.memory_space<vmem>>, vector<8x16xbf16>
    %c0_9 = arith.constant 0 : index
    %c0_10 = arith.constant 0 : index
    %12 = vector.load %arg4[%c0_9, %c0_10] : memref<16x32xbf16, #tpu.memory_space<vmem>>, vector<16x32xbf16>
    %cst_11 = arith.constant dense<0.000000e+00> : vector<8x32xf32>
    %13 = tpu.matmul %11, %12, %cst_11 {dimension_numbers = #tpu.dot_dimension_numbers<[1], [0], [0], [1], [0, 0, 1, 1], [], []>} : vector<8x16xbf16>, vector<16x32xbf16>, vector<8x32xf32> -> vector<8x32xf32>
    %14 = vector.extract_strided_slice %0 {offsets = [1, 0], sizes = [1, 32], strides = [1, 1]} : vector<4x32xf32> to vector<1x32xf32>
    %15 = vector.broadcast %14 : vector<1x32xf32> to vector<8x32xf32>
    %16 = arith.addf %13, %15 : vector<8x32xf32>
    %cst_12 = arith.constant 0.000000e+00 : f32
    %17 = vector.broadcast %cst_12 : f32 to vector<8x32xf32>
    %18 = arith.maximumf %16, %17 : vector<8x32xf32>
    %19 = vector.extract_strided_slice %0 {offsets = [2, 0], sizes = [1, 32], strides = [1, 1]} : vector<4x32xf32> to vector<1x32xf32>
    %20 = vector.broadcast %19 : vector<1x32xf32> to vector<8x32xf32>
    %21 = arith.mulf %10, %20 : vector<8x32xf32>
    %cst_13 = arith.constant dense<0.000000e+00> : vector<8xf32>
    %22 = vector.multi_reduction <add>, %21, %cst_13 [1] : vector<8x32xf32> to vector<8xf32>
    %23 = vector.extract_strided_slice %0 {offsets = [3, 0], sizes = [1, 32], strides = [1, 1]} : vector<4x32xf32> to vector<1x32xf32>
    %24 = vector.broadcast %23 : vector<1x32xf32> to vector<8x32xf32>
    %25 = arith.mulf %18, %24 : vector<8x32xf32>
    %cst_14 = arith.constant dense<0.000000e+00> : vector<8xf32>
    %26 = vector.multi_reduction <add>, %25, %cst_14 [1] : vector<8x32xf32> to vector<8xf32>
    %27 = arith.addf %22, %26 : vector<8xf32>
    %28 = vector.shape_cast %27 : vector<8xf32> to vector<1x8xf32>
    %c0_15 = arith.constant 0 : index
    %c0_16 = arith.constant 0 : index
    %29 = vector.load %arg6[%c0_15, %c0_16] : memref<1x8xf32, #tpu.memory_space<vmem>>, vector<1x8xf32>
    %30 = arith.addf %28, %29 : vector<1x8xf32>
    %c0_17 = arith.constant 0 : index
    %c0_18 = arith.constant 0 : index
    %31 = vector.load %arg7[%c0_17, %c0_18] : memref<1x8xf32, #tpu.memory_space<vmem>>, vector<1x8xf32>
    tpu.vector_store %arg7[%c0_17, %c0_18], %30 {strides = array<i32>} : memref<1x8xf32, #tpu.memory_space<vmem>>, vector<1x8xf32>,
    return
  }
  func.func @transform_0(%arg0: i32) -> (i32, i32) {
    %c0_i32 = arith.constant 0 : i32
    %c0_i32_0 = arith.constant 0 : i32
    return %arg0, %c0_i32 : i32, i32
  }
  func.func @transform_1(%arg0: i32) -> (i32, i32) {
    %c0_i32 = arith.constant 0 : i32
    %c0_i32_0 = arith.constant 0 : i32
    return %arg0, %c0_i32 : i32, i32
  }
  func.func @transform_2(%arg0: i32) -> (i32, i32) {
    %c0_i32 = arith.constant 0 : i32
    %c0_i32_0 = arith.constant 0 : i32
    %c0_i32_1 = arith.constant 0 : i32
    return %c0_i32, %c0_i32_0 : i32, i32
  }
  func.func @transform_3(%arg0: i32) -> (i32, i32) {
    %c0_i32 = arith.constant 0 : i32
    %c0_i32_0 = arith.constant 0 : i32
    %c0_i32_1 = arith.constant 0 : i32
    return %c0_i32, %c0_i32_0 : i32, i32
  }
  func.func @transform_4(%arg0: i32) -> (i32, i32) {
    %c0_i32 = arith.constant 0 : i32
    %c0_i32_0 = arith.constant 0 : i32
    %c0_i32_1 = arith.constant 0 : i32
    return %c0_i32, %c0_i32_0 : i32, i32
  }
  func.func @transform_5(%arg0: i32) -> (i32, i32) {
    %c0_i32 = arith.constant 0 : i32
    %c0_i32_0 = arith.constant 0 : i32
    return %c0_i32, %arg0 : i32, i32
  }
  func.func @transform_6(%arg0: i32) -> (i32, i32) {
    %c0_i32 = arith.constant 0 : i32
    %c0_i32_0 = arith.constant 0 : i32
    return %c0_i32, %arg0 : i32, i32
  }
}

</mosaic_0001>

<llo_original>
// kernel: tpu_custom_call.1
$region0: #{tpu_custom_call.1}
  #allocation0 [shape = 'u32[]', space=smem, size = 0x4, offset = 0x4, fixed_abs, tag = 'smem constant byte address 0x4 - core index']
  #allocation1 [shape = 'u32[144,128]{1,0:T(1,128)}', space=vmem, size = 0x12000, scoped, tag = 'internal scratch']
  %s0 = inlined_call_operand.vmem [shape: bf16[64,32], index: 0, kind: input, shape index: {}]
  %s1 = inlined_call_operand.vmem [shape: bf16[8,16], index: 1, kind: input, shape index: {}]
  %s2 = inlined_call_operand.vmem [shape: bf16[32,32], index: 2, kind: input, shape index: {}]
  %s3 = inlined_call_operand.vmem [shape: bf16[16,32], index: 3, kind: input, shape index: {}]
  %s4 = inlined_call_operand.vmem [shape: f32[4,32], index: 4, kind: input, shape index: {}]
  %s5 = inlined_call_operand.vmem [shape: f32[1,8], index: 5, kind: input, shape index: {}]
  %s6 = inlined_call_operand.hbm [shape: f32[1,8], index: 6, kind: output, shape index: {}]
  %s7 = sld [smem:[#allocation0]]
  $region34: #{tpu_custom_call.1} parent=0
    _
  %s9 = ssub.s32 1, %s7
  %s10 = scalar_select 0, %s9, %s7
  $region1: #{tpu_custom_call.1} parent=0
    #allocation2 [shape = 'u8[512]{0}', space=vmem, size = 0x400, scoped, tag = 'output window, operand 0, single buffered']
    #allocation3 [shape = 's32[1]{0}', space=sflag, size = 0x4, scoped, tag = 'scoped memory for tpu_custom_call.1']
    %11 = vsyncpa [#allocation3], 0
    // Predicated region
    $region2: #{tpu_custom_call.1} parent=1 // pred_check
      _
    $region3: #{tpu_custom_call.1} parent=1 // pred_check_branch
      %13 = sbr.rel (0) target = $region5
    $region4: #{tpu_custom_call.1} parent=1 // pred_region
      _
    $region5: #{tpu_custom_call.1} parent=1 // pred_fallthru
      _
    // Predicated region
    $region6: #{tpu_custom_call.1} parent=1 // pred_check
      _
    $region7: #{tpu_custom_call.1} parent=1 // pred_check_branch
      %15 = sbr.rel (0) target = $region9
    $region8: #{tpu_custom_call.1} parent=1 // pred_region
      _
    $region9: #{tpu_custom_call.1} parent=1 // pred_fallthru
      _
    // Predicated region
    $region10: #{tpu_custom_call.1} parent=1 // pred_check
      _
    $region11: #{tpu_custom_call.1} parent=1 // pred_check_branch
      %17 = sbr.rel (0) target = $region13
    $region12: #{tpu_custom_call.1} parent=1 // pred_region
      _
    $region13: #{tpu_custom_call.1} parent=1 // pred_fallthru
      _
    // Predicated region
    $region14: #{tpu_custom_call.1} parent=1 // pred_check
      _
    $region15: #{tpu_custom_call.1} parent=1 // pred_check_branch
      %19 = sbr.rel (0) target = $region17
    $region16: #{tpu_custom_call.1} parent=1 // pred_region
      _
    $region17: #{tpu_custom_call.1} parent=1 // pred_fallthru
      _
    // Predicated region
    $region18: #{tpu_custom_call.1} parent=1 // pred_check
      _
    $region19: #{tpu_custom_call.1} parent=1 // pred_check_branch
      %21 = sbr.rel (0) target = $region21
    $region20: #{tpu_custom_call.1} parent=1 // pred_region
      _
    $region21: #{tpu_custom_call.1} parent=1 // pred_fallthru
      _
    // Predicated region
    $region22: #{tpu_custom_call.1} parent=1 // pred_check
      _
    $region23: #{tpu_custom_call.1} parent=1 // pred_check_branch
      %23 = sbr.rel (0) target = $region25
    $region24: #{tpu_custom_call.1} parent=1 // pred_region
      _
    $region25: #{tpu_custom_call.1} parent=1 // pred_fallthru
      _
    %v25 = vld [vmem:[%s4] sm:$0xf]
    %v26 = vld [vmem:[%s0] sm:$0xf]
    %v27 = vld [vmem:[%s0 + $0x4] sm:$0xf]
    %v28 = vld [vmem:[%s0 + $0x8] sm:$0xf]
    %v29 = vld [vmem:[%s0 + $0xc] sm:$0xf]
    %v30 = vld [vmem:[%s0 + $0x10] sm:$0xf]
    %v31 = vld [vmem:[%s0 + $0x14] sm:$0xf]
    %v32 = vld [vmem:[%s0 + $0x18] sm:$0xf]
    %v33 = vld [vmem:[%s0 + $0x1c] sm:$0xf]
    %v34 = vld [vmem:[%s2] sm:$0xf]
    %v35 = vld [vmem:[%s2 + $0x4] sm:$0xf]
    %v36 = vld [vmem:[%s2 + $0x8] sm:$0xf]
    %v37 = vld [vmem:[%s2 + $0xc] sm:$0xf]
    %v38 = vlaneseq
    %v39 = vshrl.u32 %v38, 7
    %v40 = vsub.s32 0, %v39
    %v41 = vrot.slane %v25, %v40
    %v50 = vunpack.c.l.b16 %v26
    %v51 = vunpack.c.l.b16 %v27
    %v52 = vunpack.c.l.b16 %v28
    %v53 = vunpack.c.l.b16 %v29
    %v54 = vunpack.c.l.b16 %v30
    %v55 = vunpack.c.l.b16 %v31
    %v56 = vunpack.c.l.b16 %v32
    %v57 = vunpack.c.l.b16 %v33
    %v58 = vpack.c.b16 %v51, %v50
    %v59 = vpack.c.b16 %v53, %v52
    %v60 = vpack.c.b16 %v55, %v54
    %v61 = vpack.c.b16 %v57, %v56
    %v66 = vunpack.c.l.b16 %v34
    %v67 = vunpack.c.l.b16 %v35
    %v68 = vunpack.c.l.b16 %v36
    %v69 = vunpack.c.l.b16 %v37
    %v70 = vpack.c.b16 %v67, %v66
    %v71 = vpack.c.b16 %v69, %v68
    %vm74 = vcmask 261120
    %v76 = vsel %vm74, %v58, 0
    %v79 = vsel %vm74, %v59, 0
    %v82 = vsel %vm74, %v60, 0
    %v85 = vsel %vm74, %v61, 0
    %87 = vmatprep.subr.bf16.mxu0 0
    %88 = vmatpush1.bf16.msra.mxu0 %v70
    %89 = vmatprep.subr.bf16.mxu0 0
    %90 = vmatpush1.bf16.msra.mxu0 %v71
    %91 = vmatprep.subr.bf16.mxu0 0
    %92 = vmatpush1.bf16.msra.mxu0 0
    %93 = vmatprep.subr.bf16.mxu0 0
    %94 = vmatpush1.bf16.msra.mxu0 0
    %95 = vmatprep.subr.bf16.mxu0 0
    %96 = vmatpush1.bf16.msra.mxu0 0
    %97 = vmatprep.subr.bf16.mxu0 0
    %98 = vmatpush1.bf16.msra.mxu0 0
    %99 = vmatprep.subr.bf16.mxu0 0
    %100 = vmatpush1.bf16.msra.mxu0 0
    %101 = vmatprep.subr.bf16.mxu0 0
    %102 = vmatpush1.bf16.msra.mxu0 0
    %103 = vmatprep.subr.bf16.mxu0 0
    %104 = vmatpush1.bf16.msra.mxu0 0
    %105 = vmatprep.subr.bf16.mxu0 0
    %106 = vmatpush1.bf16.msra.mxu0 0
    %107 = vmatprep.subr.bf16.mxu0 0
    %108 = vmatpush1.bf16.msra.mxu0 0
    %109 = vmatprep.subr.bf16.mxu0 0
    %110 = vmatpush1.bf16.msra.mxu0 0
    %111 = vmatprep.subr.bf16.mxu0 0
    %112 = vmatpush1.bf16.msra.mxu0 0
    %113 = vmatprep.subr.bf16.mxu0 0
    %114 = vmatpush1.bf16.msra.mxu0 0
    %115 = vmatprep.subr.bf16.mxu0 0
    %116 = vmatpush1.bf16.msra.mxu0 0
    %117 = vmatprep.subr.bf16.mxu0 0
    %118 = vmatpush1.bf16.msra.mxu0 0
    %119 = vmatprep.mubr.bf16.mxu0 0
    %120 = vmatmul.mubr.bf16.gmra.mrb[0].mxu0 %v76
    %v121 = vpop.f32.mrb[0].mxu0
    %v122 = vadd.f32 %v41, %v121
    %v123 = vpop.f32.mrb[0].mxu0
    %v124 = vpop.f32.mrb[0].mxu0
    %v125 = vadd.f32 %v41, %v124
    %v126 = vpop.f32.mrb[0].mxu0
    %127 = vmatprep.mubr.bf16.mxu0 0
    %128 = vmatmul.mubr.bf16.gmra.mrb[0].mxu0 %v79
    %v129 = vpop.f32.mrb[0].mxu0
    %v130 = vadd.f32 %v41, %v129
    %v131 = vpop.f32.mrb[0].mxu0
    %v132 = vpop.f32.mrb[0].mxu0
    %v133 = vadd.f32 %v41, %v132
    %v134 = vpop.f32.mrb[0].mxu0
    %135 = vmatprep.mubr.bf16.mxu0 0
    %136 = vmatmul.mubr.bf16.gmra.mrb[0].mxu0 %v82
    %v137 = vpop.f32.mrb[0].mxu0
    %v138 = vadd.f32 %v41, %v137
    %v139 = vpop.f32.mrb[0].mxu0
    %v140 = vpop.f32.mrb[0].mxu0
    %v141 = vadd.f32 %v41, %v140
    %v142 = vpop.f32.mrb[0].mxu0
    %143 = vmatprep.mubr.bf16.mxu0 0
    %144 = vmatmul.mubr.bf16.gmra.mrb[0].mxu0 %v85
    %v145 = vpop.f32.mrb[0].mxu0
    %v146 = vadd.f32 %v41, %v145
    %v147 = vpop.f32.mrb[0].mxu0
    %v148 = vpop.f32.mrb[0].mxu0
    %v149 = vadd.f32 %v41, %v148
    %v150 = vpop.f32.mrb[0].mxu0
    %151 = vdwg.mxu0
    %v152 = vmax.f32 %v122, 0.0
    %v153 = vmax.f32 %v125, 0.0
    %v154 = vmax.f32 %v130, 0.0
    %v155 = vmax.f32 %v133, 0.0
    %v156 = vmax.f32 %v138, 0.0
    %v157 = vmax.f32 %v141, 0.0
    %v158 = vmax.f32 %v146, 0.0
    %v159 = vmax.f32 %v149, 0.0
    %v160 = vsel %vm74, %v152, 0.0
    %v161 = vrot.slane %v160, 4
    %v162 = vadd.f32 %v160, %v161
    %v163 = vrot.slane %v162, 2
    %v164 = vadd.f32 %v162, %v163
    %v165 = vrot.slane %v164, 1
    %v166 = vadd.f32 %v164, %v165
    %v167 = vsel %vm74, %v153, 0.0
    %v168 = vrot.slane %v167, 4
    %v169 = vadd.f32 %v167, %v168
    %v170 = vrot.slane %v169, 2
    %v171 = vadd.f32 %v169, %v170
    %v172 = vrot.slane %v171, 1
    %v173 = vadd.f32 %v171, %v172
    %v174 = vsel %vm74, %v154, 0.0
    %v175 = vrot.slane %v174, 4
    %v176 = vadd.f32 %v174, %v175
    %v177 = vrot.slane %v176, 2
    %v178 = vadd.f32 %v176, %v177
    %v179 = vrot.slane %v178, 1
    %v180 = vadd.f32 %v178, %v179
    %v181 = vsel %vm74, %v155, 0.0
    %v182 = vrot.slane %v181, 4
    %v183 = vadd.f32 %v181, %v182
    %v184 = vrot.slane %v183, 2
    %v185 = vadd.f32 %v183, %v184
    %v186 = vrot.slane %v185, 1
    %v187 = vadd.f32 %v185, %v186
    %v188 = vsel %vm74, %v156, 0.0
    %v189 = vrot.slane %v188, 4
    %v190 = vadd.f32 %v188, %v189
    %v191 = vrot.slane %v190, 2
    %v192 = vadd.f32 %v190, %v191
    %v193 = vrot.slane %v192, 1
    %v194 = vadd.f32 %v192, %v193
    %v195 = vsel %vm74, %v157, 0.0
    %v196 = vrot.slane %v195, 4
    %v197 = vadd.f32 %v195, %v196
    %v198 = vrot.slane %v197, 2
    %v199 = vadd.f32 %v197, %v198
    %v200 = vrot.slane %v199, 1
    %v201 = vadd.f32 %v199, %v200
    %v202 = vsel %vm74, %v158, 0.0
    %v203 = vrot.slane %v202, 4
    %v204 = vadd.f32 %v202, %v203
    %v205 = vrot.slane %v204, 2
    %v206 = vadd.f32 %v204, %v205
    %v207 = vrot.slane %v206, 1
    %v208 = vadd.f32 %v206, %v207
    %v209 = vsel %vm74, %v159, 0.0
    %v210 = vrot.slane %v209, 4
    %v211 = vadd.f32 %v209, %v210
    %v212 = vrot.slane %v211, 2
    %v213 = vadd.f32 %v211, %v212
    %v214 = vrot.slane %v213, 1
    %v215 = vadd.f32 %v213, %v214
    %v216 = vld [vmem:[%s1] sm:$0xf]
    %v217 = vld [vmem:[%s3] sm:$0xf]
    %v218 = vld [vmem:[%s3 + $0x4] sm:$0xf]
    %v219 = vlaneseq
    %v220 = vshrl.u32 %v219, 7
    %v221 = vsub.s32 1, %v220
    %v222 = vrot.slane %v25, %v221
    %v225 = vunpack.c.l.b16 %v217
    %v226 = vunpack.c.l.b16 %v218
    %v227 = vpack.c.b16 %v226, %v225
    %vm229 = vcmask 130048
    %v231 = vsel %vm229, %v216, 0
    %233 = vmatprep.subr.bf16.mxu0 0
    %234 = vmatpush1.bf16.msra.mxu0 %v227
    %235 = vmatprep.subr.bf16.mxu0 0
    %236 = vmatpush1.bf16.msra.mxu0 0
    %237 = vmatprep.subr.bf16.mxu0 0
    %238 = vmatpush1.bf16.msra.mxu0 0
    %239 = vmatprep.subr.bf16.mxu0 0
    %240 = vmatpush1.bf16.msra.mxu0 0
    %241 = vmatprep.subr.bf16.mxu0 0
    %242 = vmatpush1.bf16.msra.mxu0 0
    %243 = vmatprep.subr.bf16.mxu0 0
    %244 = vmatpush1.bf16.msra.mxu0 0
    %245 = vmatprep.subr.bf16.mxu0 0
    %246 = vmatpush1.bf16.msra.mxu0 0
    %247 = vmatprep.subr.bf16.mxu0 0
    %248 = vmatpush1.bf16.msra.mxu0 0
    %249 = vmatprep.subr.bf16.mxu0 0
    %250 = vmatpush1.bf16.msra.mxu0 0
    %251 = vmatprep.subr.bf16.mxu0 0
    %252 = vmatpush1.bf16.msra.mxu0 0
    %253 = vmatprep.subr.bf16.mxu0 0
    %254 = vmatpush1.bf16.msra.mxu0 0
    %255 = vmatprep.subr.bf16.mxu0 0
    %256 = vmatpush1.bf16.msra.mxu0 0
    %257 = vmatprep.subr.bf16.mxu0 0
    %258 = vmatpush1.bf16.msra.mxu0 0
    %259 = vmatprep.subr.bf16.mxu0 0
    %260 = vmatpush1.bf16.msra.mxu0 0
    %261 = vmatprep.subr.bf16.mxu0 0
    %262 = vmatpush1.bf16.msra.mxu0 0
    %263 = vmatprep.subr.bf16.mxu0 0
    %264 = vmatpush1.bf16.msra.mxu0 0
    %265 = vmatprep.mubr.bf16.mxu0 0
    %266 = vmatmul.mubr.bf16.gmra.mrb[0].mxu0 %v231
    %v267 = vpop.f32.mrb[0].mxu0
    %v268 = vadd.f32 %v222, %v267
    %v269 = vpop.f32.mrb[0].mxu0
    %v270 = vpop.f32.mrb[0].mxu0
    %v271 = vpop.f32.mrb[0].mxu0
    %272 = vdwg.mxu0
    %v273 = vmax.f32 %v268, 0.0
    %v274 = vlaneseq
    %v275 = vshrl.u32 %v274, 7
    %v276 = vsub.s32 2, %v275
    %v277 = vrot.slane %v25, %v276
    %v278 = vmul.f32 %v166, %v277
    %v279 = vmul.f32 %v173, %v277
    %v280 = vmul.f32 %v180, %v277
    %v281 = vmul.f32 %v187, %v277
    %v282 = vmul.f32 %v194, %v277
    %v283 = vmul.f32 %v201, %v277
    %v284 = vmul.f32 %v208, %v277
    %v285 = vmul.f32 %v215, %v277
    %v294 = vrot.slane %v279, 7
    %vm295 = vcmask 1041409
    %v296 = vsel %vm295, %v294, %v278
    %v297 = vrot.slane %v280, 6
    %vm298 = vcmask 1042434
    %v299 = vsel %vm298, %v297, %v296
    %v300 = vrot.slane %v281, 5
    %vm301 = vcmask 1043459
    %v302 = vsel %vm301, %v300, %v299
    %v303 = vrot.slane %v282, 4
    %vm304 = vcmask 1044484
    %v305 = vsel %vm304, %v303, %v302
    %v306 = vrot.slane %v283, 3
    %vm307 = vcmask 1045509
    %v308 = vsel %vm307, %v306, %v305
    %v309 = vrot.slane %v284, 2
    %vm310 = vcmask 1046534
    %v311 = vsel %vm310, %v309, %v308
    %v312 = vrot.slane %v285, 1
    %vm313 = vcmask 1047559
    %v314 = vsel %vm313, %v312, %v311
    %v316 = vsel %vm74, %v314, 0.0
    %317 = vadd.xlane.f32.xlu0 %v316
    %v318 = vpop.xlane.xlu0 %317
    %v319 = vlaneseq
    %v320 = vshrl.u32 %v319, 7
    %v321 = vsub.s32 3, %v320
    %v322 = vrot.slane %v25, %v321
    %v323 = vmul.f32 %v273, %v322
    %v324 = vsel %vm74, %v323, 0.0
    %325 = vadd.xlane.f32.xlu0 %v324
    %v326 = vpop.xlane.xlu0 %325
    %v327 = vadd.f32 %v318, %v326
    %v328 = vld [vmem:[%s5] sm:$0x1]
    %v330 = vlaneseq
    %v331 = vshrl.u32 %v330, 7
    %v332 = vsub.s32 0, %v331
    %v333 = vrot.slane %v328, %v332
    %335 = vbcast.lane.b32.xlu0 %v333, 256
    %v336 = vpop.permute.xlu0 %335
    %v338 = vadd.f32 %v327, %v336
    %340 = vset.pattern.permute.xlu0 0
    %341 = vperm.xlu0 %340, %v338
    %v342 = vpop.permute.xlu0 %341
    %v343 = vlaneseq
    %v344 = vand.u32 %v343, 127
    %v345 = vlaneseq
    %v346 = vshrl.u32 %v345, 7
    %v347 = vsub.s32 %v344, %v346
    %v348 = vrot.slane %v342, %v347
    %vm350 = vcmask 57344
    %351 = vst.msk [vmem:[#allocation2] sm:$0x1] %vm350, %v348
    // Predicated region
    $region26: #{tpu_custom_call.1} parent=1 // pred_check
      _
    $region27: #{tpu_custom_call.1} parent=1 // pred_check_branch
      %353 = sbr.rel (0) target = $region29
    $region28: #{tpu_custom_call.1} parent=1 // pred_region
      %s355 = ssub.s32 16, 16
      %356 = vsyncadd [#allocation3], %s355
      %s358 = sshll.u32 [#allocation2], 4
      %s359 = int_to_ptr.vmem [resolvable:$true] %s358
      %361 = dma.vmem_to_hbm [thread:$0]  %s359, 16, %s6, [#allocation3]
    $region29: #{tpu_custom_call.1} parent=1 // pred_fallthru
      _
    // Predicated region
    $region30: #{tpu_custom_call.1} parent=1 // pred_check
      _
    $region31: #{tpu_custom_call.1} parent=1 // pred_check_branch
      %363 = sbr.rel (0) target = $region33
    $region32: #{tpu_custom_call.1} parent=1 // pred_region
      %364 = dma.done [#allocation3], 16
    $region33: #{tpu_custom_call.1} parent=1 // pred_fallthru
      _
    %365 = vsyncpa [#allocation3], 1

</llo_original>
